<compile_context>
chip_gen: v7x
topology: tpu7x:2x2x1
jax: 0.10.0
libtpu: 0.0.40
codegen_flags: <defaults>
</compile_context>

<pallas_src>
import jax
import jax.numpy as jnp
from jax.experimental import pallas as pl
from jax.experimental.pallas import tpu as pltpu

# ---- problem constants (match the PyTorch module with L_in = 360) ----
L_IN = 360
K1, S1, C1 = 5, 3, 16          # Conv1d(1 -> 16, k=5, stride=3)
K2, S2, C2 = 5, 3, 32          # Conv1d(16 -> 32, k=5, stride=3)
L1 = (L_IN - K1) // S1 + 1     # 119
L2 = (L1 - K2) // S2 + 1       # 39
L1_PAD = 128                   # lane-padded layer-1 length
# Phase-major layer-1 position order: [l%3==0 (40), l%3==1 (40), l%3==2 (39)].
# With that ordering, layer-2 tap k at output o reads lane TAP_OFF[k] + o.
PH0, PH1 = 40, 40
TAP_OFF = (0, PH0, PH0 + PH1, 1, PH0 + 1)      # (0, 40, 80, 1, 41)


# ---------------- fused Pallas kernel: conv1+BN+ReLU -> conv2+BN+ReLU ----------------
def fused_block_kernel(xs_ref, w1_ref, b1_ref, w2_ref, b2_ref, o_ref):
    # xs_ref: (1, K1, 128)  layer-1 taps, lanes = phase-major positions (zero padded)
    # w1_ref: (C1, K1)   BN-scaled layer-1 weights;  b1_ref: (C1, 1) folded bias
    # w2_ref: (C2, K2*C1) BN-scaled layer-2 weights, column index = k*C1 + c_in
    # b2_ref: (C2, 1)    folded bias;  o_ref: (1, C2, L2)
    xs = xs_ref[0]                                     # (K1, 128)
    w1 = w1_ref[...]                                   # (C1, K1)

    # ---- Layer 1: C_in=1 conv as K1 lane-dense VPU FMAs (no MXU, no gather) ----
    acc1 = w1[:, 0:1] * xs[0:1, :]
    for j in range(1, K1):
        acc1 = acc1 + w1[:, j:j + 1] * xs[j:j + 1, :]
    h1 = jnp.maximum(acc1 + b1_ref[...], 0.0)          # (C1, 128), stays on-chip

    # ---- Layer 2: stride-3 windows are contiguous lane slices of phase-major h1 ----
    patches = jnp.concatenate([h1[:, off:off + L2] for off in TAP_OFF], axis=0)  # (K2*C1, L2)
    y2 = jnp.dot(w2_ref[...], patches, preferred_element_type=jnp.float32)       # (C2, L2)
    o_ref[0] = jnp.maximum(y2 + b2_ref[...], 0.0)


# ---------------- wrapper: weight folding, strided-slice tap prep, pallas_call ----------------
@jax.jit
def my_basic_block_forward(x, params):
    """x: (N, 1, 360) float32 -> (N, 1248) float32 (matches x.view(-1, 32*39))."""
    N = x.shape[0]
    f32 = jnp.float32

    # Fold eval-mode BN scale into conv weights (conv bias + BN shift already in b*).
    w1f = (params["w1"][:, 0, :] * params["s1"][:, None]).astype(f32)            # (16, 5)
    b1f = params["b1"].reshape(C1, 1).astype(f32)
    w2f = (params["w2"] * params["s2"][:, None, None]).astype(f32)               # (32, 16, 5)
    w2m = jnp.transpose(w2f, (0, 2, 1)).reshape(C2, K2 * C1)                     # [:, k*16+cin]
    b2f = params["b2"].reshape(C2, 1).astype(f32)

    # Layer-1 taps via plain strided slices (no gather), phase-major position order.
    taps = jnp.stack(
        [x[:, 0, j:j + S1 * (L1 - 1) + 1:S1] for j in range(K1)], axis=1)        # (N, 5, 119)
    xs_ph = jnp.concatenate([taps[:, :, p::3] for p in range(3)], axis=-1)       # (N, 5, 119)
    xs_ph = jnp.pad(xs_ph, ((0, 0), (0, 0), (0, L1_PAD - L1))).astype(f32)       # (N, 5, 128)

    flops = N * (2 * K1 * C1 * L1 + 2 * (K2 * C1) * C2 * L2)
    bytes_accessed = 4 * (xs_ph.size + w1f.size + b1f.size + w2m.size + b2f.size + N * C2 * L2)

    out = pl.pallas_call(
        fused_block_kernel,
        out_shape=jax.ShapeDtypeStruct((N, C2, L2), f32),
        grid=(N,),
        in_specs=[
            pl.BlockSpec((1, K1, L1_PAD), lambda n: (n, 0, 0)),
            pl.BlockSpec((C1, K1), lambda n: (0, 0)),
            pl.BlockSpec((C1, 1), lambda n: (0, 0)),
            pl.BlockSpec((C2, K2 * C1), lambda n: (0, 0)),
            pl.BlockSpec((C2, 1), lambda n: (0, 0)),
        ],
        out_specs=pl.BlockSpec((1, C2, L2), lambda n: (n, 0, 0)),
        compiler_params=pltpu.CompilerParams(
            dimension_semantics=("parallel",),        # shard batch across TCs (v7x megacore)
            vmem_limit_bytes=32 * 1024 * 1024,
        ),
        cost_estimate=pl.CostEstimate(
            flops=flops, transcendentals=0, bytes_accessed=bytes_accessed),
    )(xs_ph, w1f, b1f, w2m, b2f)

    # Flatten exactly like PyTorch x.view(-1, 32*39): channel-major per sample.
    return out.reshape(N, C2 * L2)


# ---------------- deterministic params (eval-mode BN folding) ----------------
def init_params(key):
    k1, k2, k3, k4 = jax.random.split(key, 4)
    eps = 1e-5
    w1 = jax.random.normal(k1, (C1, 1, K1), jnp.float32) * 0.1
    cb1 = jax.random.normal(k2, (C1,), jnp.float32) * 0.1
    g1, beta1 = jnp.ones((C1,)), jnp.zeros((C1,))
    rm1, rv1 = jnp.zeros((C1,)), jnp.ones((C1,))
    s1 = g1 / jnp.sqrt(rv1 + eps)
    b1 = (cb1 - rm1) * s1 + beta1
    w2 = jax.random.normal(k3, (C2, C1, K2), jnp.float32) * 0.05
    cb2 = jax.random.normal(k4, (C2,), jnp.float32) * 0.1
    g2, beta2 = jnp.ones((C2,)), jnp.zeros((C2,))
    rm2, rv2 = jnp.zeros((C2,)), jnp.ones((C2,))
    s2 = g2 / jnp.sqrt(rv2 + eps)
    b2 = (cb2 - rm2) * s2 + beta2
    return dict(w1=w1, s1=s1, b1=b1, w2=w2, s2=s2, b2=b2)


# ---------------- pure-JAX reference (correctness check only) ----------------
def reference_forward(x, params):
    def conv1d(h, w, stride):
        cout, cin, k = w.shape
        lout = (h.shape[-1] - k) // stride + 1
        taps = jnp.stack(
            [h[:, :, j:j + stride * (lout - 1) + 1:stride] for j in range(k)], axis=-1)
        return jnp.einsum("nilk,oik->nol", taps, w)

    h1 = conv1d(x, params["w1"], S1) * params["s1"][None, :, None] + params["b1"][None, :, None]
    h1 = jnp.maximum(h1, 0.0)
    h2 = conv1d(h1, params["w2"], S2) * params["s2"][None, :, None] + params["b2"][None, :, None]
    h2 = jnp.maximum(h2, 0.0)
    return h2.reshape(x.shape[0], -1)


if __name__ == "__main__":
    key = jax.random.PRNGKey(0)
    pkey, xkey = jax.random.split(key)
    params = init_params(pkey)
    x = jax.random.normal(xkey, (2, 1, L_IN), jnp.float32)     # NCL, C_in=1

    out = my_basic_block_forward(x, params)
    out = jax.block_until_ready(out)

    assert out.shape == (2, C2 * L2), out.shape
    assert bool(jnp.all(jnp.isfinite(out)))
    ref = reference_forward(x, params)
    assert bool(jnp.allclose(out, ref, atol=1e-4, rtol=1e-4)), float(jnp.max(jnp.abs(out - ref)))
    print("KERNEL_OK")
</pallas_src>

<mosaic_0001>
module attributes {stable_mosaic.version = 11 : i64} {
  func.func @fused_block_kernel(%arg0: i32, %arg1: memref<1x5x128xf32, #tpu.memory_space<vmem>>, %arg2: memref<16x5xf32, #tpu.memory_space<vmem>>, %arg3: memref<16x1xf32, #tpu.memory_space<vmem>>, %arg4: memref<32x80xf32, #tpu.memory_space<vmem>>, %arg5: memref<32x1xf32, #tpu.memory_space<vmem>>, %arg6: memref<1x32x39xf32, #tpu.memory_space<vmem>>) attributes {dimension_semantics = [#tpu.dimension_semantics<parallel>], iteration_bounds = array<i64: 2>, scalar_prefetch = 0 : i64, scratch_operands = 0 : i64, tpu.core_type = #tpu.core_type<tc>, window_params = [{transform_indices = @transform_0, window_bounds = array<i64: 1, 5, 128>}, {pipeline_mode = #tpu.pipeline_mode<synchronous>, transform_indices = @transform_1, window_bounds = array<i64: 16, 5>}, {pipeline_mode = #tpu.pipeline_mode<synchronous>, transform_indices = @transform_2, window_bounds = array<i64: 16, 1>}, {pipeline_mode = #tpu.pipeline_mode<synchronous>, transform_indices = @transform_3, window_bounds = array<i64: 32, 80>}, {pipeline_mode = #tpu.pipeline_mode<synchronous>, transform_indices = @transform_4, window_bounds = array<i64: 32, 1>}, {transform_indices = @transform_5, window_bounds = array<i64: 1, 32, 39>}]} {
    %c0 = arith.constant 0 : index
    %c0_0 = arith.constant 0 : index
    %c0_1 = arith.constant 0 : index
    %0 = vector.load %arg1[%c0, %c0_0, %c0_1] : memref<1x5x128xf32, #tpu.memory_space<vmem>>, vector<1x5x128xf32>
    %1 = vector.shape_cast %0 : vector<1x5x128xf32> to vector<5x128xf32>
    %c0_2 = arith.constant 0 : index
    %c0_3 = arith.constant 0 : index
    %2 = vector.load %arg2[%c0_2, %c0_3] : memref<16x5xf32, #tpu.memory_space<vmem>>, vector<16x5xf32>
    %3 = vector.extract_strided_slice %2 {offsets = [0, 0], sizes = [16, 1], strides = [1, 1]} : vector<16x5xf32> to vector<16x1xf32>
    %4 = vector.extract_strided_slice %1 {offsets = [0, 0], sizes = [1, 128], strides = [1, 1]} : vector<5x128xf32> to vector<1x128xf32>
    %5 = vector.broadcast %3 : vector<16x1xf32> to vector<16x128xf32>
    %6 = vector.broadcast %4 : vector<1x128xf32> to vector<16x128xf32>
    %7 = arith.mulf %5, %6 : vector<16x128xf32>
    %8 = vector.extract_strided_slice %2 {offsets = [0, 1], sizes = [16, 1], strides = [1, 1]} : vector<16x5xf32> to vector<16x1xf32>
    %9 = vector.extract_strided_slice %1 {offsets = [1, 0], sizes = [1, 128], strides = [1, 1]} : vector<5x128xf32> to vector<1x128xf32>
    %10 = vector.broadcast %8 : vector<16x1xf32> to vector<16x128xf32>
    %11 = vector.broadcast %9 : vector<1x128xf32> to vector<16x128xf32>
    %12 = arith.mulf %10, %11 : vector<16x128xf32>
    %13 = arith.addf %7, %12 : vector<16x128xf32>
    %14 = vector.extract_strided_slice %2 {offsets = [0, 2], sizes = [16, 1], strides = [1, 1]} : vector<16x5xf32> to vector<16x1xf32>
    %15 = vector.extract_strided_slice %1 {offsets = [2, 0], sizes = [1, 128], strides = [1, 1]} : vector<5x128xf32> to vector<1x128xf32>
    %16 = vector.broadcast %14 : vector<16x1xf32> to vector<16x128xf32>
    %17 = vector.broadcast %15 : vector<1x128xf32> to vector<16x128xf32>
    %18 = arith.mulf %16, %17 : vector<16x128xf32>
    %19 = arith.addf %13, %18 : vector<16x128xf32>
    %20 = vector.extract_strided_slice %2 {offsets = [0, 3], sizes = [16, 1], strides = [1, 1]} : vector<16x5xf32> to vector<16x1xf32>
    %21 = vector.extract_strided_slice %1 {offsets = [3, 0], sizes = [1, 128], strides = [1, 1]} : vector<5x128xf32> to vector<1x128xf32>
    %22 = vector.broadcast %20 : vector<16x1xf32> to vector<16x128xf32>
    %23 = vector.broadcast %21 : vector<1x128xf32> to vector<16x128xf32>
    %24 = arith.mulf %22, %23 : vector<16x128xf32>
    %25 = arith.addf %19, %24 : vector<16x128xf32>
    %26 = vector.extract_strided_slice %2 {offsets = [0, 4], sizes = [16, 1], strides = [1, 1]} : vector<16x5xf32> to vector<16x1xf32>
    %27 = vector.extract_strided_slice %1 {offsets = [4, 0], sizes = [1, 128], strides = [1, 1]} : vector<5x128xf32> to vector<1x128xf32>
    %28 = vector.broadcast %26 : vector<16x1xf32> to vector<16x128xf32>
    %29 = vector.broadcast %27 : vector<1x128xf32> to vector<16x128xf32>
    %30 = arith.mulf %28, %29 : vector<16x128xf32>
    %31 = arith.addf %25, %30 : vector<16x128xf32>
    %c0_4 = arith.constant 0 : index
    %c0_5 = arith.constant 0 : index
    %32 = vector.load %arg3[%c0_4, %c0_5] : memref<16x1xf32, #tpu.memory_space<vmem>>, vector<16x1xf32>
    %33 = vector.broadcast %32 : vector<16x1xf32> to vector<16x128xf32>
    %34 = arith.addf %31, %33 : vector<16x128xf32>
    %cst = arith.constant 0.000000e+00 : f32
    %35 = vector.broadcast %cst : f32 to vector<16x128xf32>
    %36 = arith.maximumf %34, %35 : vector<16x128xf32>
    %37 = vector.extract_strided_slice %36 {offsets = [0, 0], sizes = [16, 39], strides = [1, 1]} : vector<16x128xf32> to vector<16x39xf32>
    %38 = vector.extract_strided_slice %36 {offsets = [0, 40], sizes = [16, 39], strides = [1, 1]} : vector<16x128xf32> to vector<16x39xf32>
    %39 = vector.extract_strided_slice %36 {offsets = [0, 80], sizes = [16, 39], strides = [1, 1]} : vector<16x128xf32> to vector<16x39xf32>
    %40 = vector.extract_strided_slice %36 {offsets = [0, 1], sizes = [16, 39], strides = [1, 1]} : vector<16x128xf32> to vector<16x39xf32>
    %41 = vector.extract_strided_slice %36 {offsets = [0, 41], sizes = [16, 39], strides = [1, 1]} : vector<16x128xf32> to vector<16x39xf32>
    %42 = tpu.concatenate %37, %38, %39, %40, %41 in 0 : vector<16x39xf32>, vector<16x39xf32>, vector<16x39xf32>, vector<16x39xf32>, vector<16x39xf32> -> vector<80x39xf32>
    %c0_6 = arith.constant 0 : index
    %c0_7 = arith.constant 0 : index
    %43 = vector.load %arg4[%c0_6, %c0_7] : memref<32x80xf32, #tpu.memory_space<vmem>>, vector<32x80xf32>
    %cst_8 = arith.constant dense<0.000000e+00> : vector<32x39xf32>
    %44 = tpu.matmul %43, %42, %cst_8 {dimension_numbers = #tpu.dot_dimension_numbers<[1], [0], [0], [1], [0, 0, 1, 1], [], []>} : vector<32x80xf32>, vector<80x39xf32>, vector<32x39xf32> -> vector<32x39xf32>
    %c0_9 = arith.constant 0 : index
    %c0_10 = arith.constant 0 : index
    %45 = vector.load %arg5[%c0_9, %c0_10] : memref<32x1xf32, #tpu.memory_space<vmem>>, vector<32x1xf32>
    %46 = vector.broadcast %45 : vector<32x1xf32> to vector<32x39xf32>
    %47 = arith.addf %44, %46 : vector<32x39xf32>
    %cst_11 = arith.constant 0.000000e+00 : f32
    %48 = vector.broadcast %cst_11 : f32 to vector<32x39xf32>
    %49 = arith.maximumf %47, %48 : vector<32x39xf32>
    %c0_12 = arith.constant 0 : index
    %c0_13 = arith.constant 0 : index
    %c0_14 = arith.constant 0 : index
    %50 = vector.load %arg6[%c0_12, %c0_13, %c0_14] : memref<1x32x39xf32, #tpu.memory_space<vmem>>, vector<1x32x39xf32>
    %51 = vector.shape_cast %50 : vector<1x32x39xf32> to vector<32x39xf32>
    %52 = vector.shape_cast %49 : vector<32x39xf32> to vector<1x32x39xf32>
    tpu.vector_store %arg6[%c0_12, %c0_13, %c0_14], %52 {strides = array<i32>} : memref<1x32x39xf32, #tpu.memory_space<vmem>>, vector<1x32x39xf32>,
    return
  }
  func.func @transform_0(%arg0: i32) -> (i32, i32, i32) {
    %c0_i32 = arith.constant 0 : i32
    %c0_i32_0 = arith.constant 0 : i32
    %c0_i32_1 = arith.constant 0 : i32
    return %arg0, %c0_i32, %c0_i32_0 : i32, i32, i32
  }
  func.func @transform_1(%arg0: i32) -> (i32, i32) {
    %c0_i32 = arith.constant 0 : i32
    %c0_i32_0 = arith.constant 0 : i32
    %c0_i32_1 = arith.constant 0 : i32
    return %c0_i32, %c0_i32_0 : i32, i32
  }
  func.func @transform_2(%arg0: i32) -> (i32, i32) {
    %c0_i32 = arith.constant 0 : i32
    %c0_i32_0 = arith.constant 0 : i32
    %c0_i32_1 = arith.constant 0 : i32
    return %c0_i32, %c0_i32_0 : i32, i32
  }
  func.func @transform_3(%arg0: i32) -> (i32, i32) {
    %c0_i32 = arith.constant 0 : i32
    %c0_i32_0 = arith.constant 0 : i32
    %c0_i32_1 = arith.constant 0 : i32
    return %c0_i32, %c0_i32_0 : i32, i32
  }
  func.func @transform_4(%arg0: i32) -> (i32, i32) {
    %c0_i32 = arith.constant 0 : i32
    %c0_i32_0 = arith.constant 0 : i32
    %c0_i32_1 = arith.constant 0 : i32
    return %c0_i32, %c0_i32_0 : i32, i32
  }
  func.func @transform_5(%arg0: i32) -> (i32, i32, i32) {
    %c0_i32 = arith.constant 0 : i32
    %c0_i32_0 = arith.constant 0 : i32
    %c0_i32_1 = arith.constant 0 : i32
    return %arg0, %c0_i32, %c0_i32_0 : i32, i32, i32
  }
}

</mosaic_0001>

<llo_original>
// kernel: my_basic_block_forward.1
$region0: #{my_basic_block_forward.1}
  #allocation0 [shape = 'u32[]', space=smem, size = 0x4, offset = 0x4, fixed_abs, tag = 'smem constant byte address 0x4 - core index']
  #allocation1 [shape = 'u32[144,128]{1,0:T(1,128)}', space=vmem, size = 0x12000, scoped, tag = 'internal scratch']
  %s0 = inlined_call_operand.vmem [shape: f32[2,5,128], index: 0, kind: input, shape index: {}]
  %s1 = inlined_call_operand.vmem [shape: f32[16,5], index: 1, kind: input, shape index: {}]
  %s2 = inlined_call_operand.vmem [shape: f32[16,1], index: 2, kind: input, shape index: {}]
  %s3 = inlined_call_operand.vmem [shape: f32[32,80], index: 3, kind: input, shape index: {}]
  %s4 = inlined_call_operand.vmem [shape: f32[32,1], index: 4, kind: input, shape index: {}]
  %s5 = inlined_call_operand.vmem [shape: f32[2,32,39], index: 5, kind: output, shape index: {}]
  %s6 = sld [smem:[#allocation0]]
  $region53: #{my_basic_block_forward.1} parent=0
    _
  %s8 = ssub.s32 1, %s6
  %s9 = scalar_select 0, %s8, %s6
  loop: start=0, step=1, limit=4
  $region2: #{my_basic_block_forward.1} parent=0 // loop_pre_header
    _
  $region3: #{my_basic_block_forward.1} parent=0 // loop_header
    %s11 = sphi 0, %s15
    %p12 = scmp.ge.s32.totalorder %s11, 4
    %s21 = sphi 0, %s23
    %s24 = sphi 0, %s21
    %s25 = sphi 0, %s24
    %s41 = sphi 0, %s25
    %s45 = sphi 0, %s45
    %s47 = sphi 0, %s45
    %s48 = sphi 0, %s47
    %s62 = sphi 0, %s48
    %s66 = sphi 0, %s66
    %s68 = sphi 0, %s66
    %s69 = sphi 0, %s68
    %s83 = sphi 0, %s69
    %s87 = sphi 0, %s87
    %s89 = sphi 0, %s87
    %s90 = sphi 0, %s89
    %s104 = sphi 0, %s90
    %s108 = sphi 0, %s108
    %s110 = sphi 0, %s108
    %s111 = sphi 0, %s110
    %s125 = sphi 0, %s111
    %s131 = sphi 0, %s133
    %s134 = sphi 0, %s131
    %s135 = sphi 0, %s134
    %s151 = sphi 0, %s135
  $region4: #{my_basic_block_forward.1} parent=0 // loop_header_branch
    %14 = sbr.rel (%p12) target = $region8
  $region5: #{my_basic_block_forward.1} parent=0 // loop_body
    %s16 = ssub.s32 %s11, 1
    %s17 = ssub.s32 %s11, 2
    %s18 = sadd.s32 %s11, 1
    %s19 = ssub.s32 %s11, %s18
    %p20 = scmp.eq.s32.totalorder %s19, 0
    %s22 = sadd.s32 %s21, 1
    %s23 = scalar_select %p20, %s21, %s22
    %p26 = pneg %p20
    %p27 = scmp.eq.s32.totalorder %s11, 1
    %p28 = por %p26, %p27
    %p29 = scmp.ne.s32.totalorder %s21, %s24
    %p30 = scmp.eq.s32.totalorder %s11, 0
    %p31 = por %p29, %p30
    %p32 = scmp.ne.s32.totalorder %s21, %s24
    %p33 = scmp.eq.s32.totalorder %s16, 1
    %p34 = por %p32, %p33
    %p35 = scmp.ne.s32.totalorder %s24, %s25
    %p36 = scmp.eq.s32.totalorder %s16, 0
    %p37 = por %p35, %p36
    %p38 = scmp.ne.s32.totalorder %s24, %s25
    %p39 = scmp.eq.s32.totalorder %s17, 1
    %p40 = por %p38, %p39
    %p42 = scmp.ne.s32.totalorder %s25, %s41
    %p43 = scmp.eq.s32.totalorder %s17, 0
    %p44 = por %p42, %p43
    %s46 = sadd.s32 %s45, 1
    %p49 = scmp.eq.s32.totalorder %s11, 1
    %p50 = scmp.ne.s32.totalorder %s45, %s47
    %p51 = scmp.eq.s32.totalorder %s11, 0
    %p52 = por %p50, %p51
    %p53 = scmp.ne.s32.totalorder %s45, %s47
    %p54 = scmp.eq.s32.totalorder %s16, 1
    %p55 = por %p53, %p54
    %p56 = scmp.ne.s32.totalorder %s47, %s48
    %p57 = scmp.eq.s32.totalorder %s16, 0
    %p58 = por %p56, %p57
    %p59 = scmp.ne.s32.totalorder %s47, %s48
    %p60 = scmp.eq.s32.totalorder %s17, 1
    %p61 = por %p59, %p60
    %p63 = scmp.ne.s32.totalorder %s48, %s62
    %p64 = scmp.eq.s32.totalorder %s17, 0
    %p65 = por %p63, %p64
    %s67 = sadd.s32 %s66, 1
    %p70 = scmp.eq.s32.totalorder %s11, 1
    %p71 = scmp.ne.s32.totalorder %s66, %s68
    %p72 = scmp.eq.s32.totalorder %s11, 0
    %p73 = por %p71, %p72
    %p74 = scmp.ne.s32.totalorder %s66, %s68
    %p75 = scmp.eq.s32.totalorder %s16, 1
    %p76 = por %p74, %p75
    %p77 = scmp.ne.s32.totalorder %s68, %s69
    %p78 = scmp.eq.s32.totalorder %s16, 0
    %p79 = por %p77, %p78
    %p80 = scmp.ne.s32.totalorder %s68, %s69
    %p81 = scmp.eq.s32.totalorder %s17, 1
    %p82 = por %p80, %p81
    %p84 = scmp.ne.s32.totalorder %s69, %s83
    %p85 = scmp.eq.s32.totalorder %s17, 0
    %p86 = por %p84, %p85
    %s88 = sadd.s32 %s87, 1
    %p91 = scmp.eq.s32.totalorder %s11, 1
    %p92 = scmp.ne.s32.totalorder %s87, %s89
    %p93 = scmp.eq.s32.totalorder %s11, 0
    %p94 = por %p92, %p93
    %p95 = scmp.ne.s32.totalorder %s87, %s89
    %p96 = scmp.eq.s32.totalorder %s16, 1
    %p97 = por %p95, %p96
    %p98 = scmp.ne.s32.totalorder %s89, %s90
    %p99 = scmp.eq.s32.totalorder %s16, 0
    %p100 = por %p98, %p99
    %p101 = scmp.ne.s32.totalorder %s89, %s90
    %p102 = scmp.eq.s32.totalorder %s17, 1
    %p103 = por %p101, %p102
    %p105 = scmp.ne.s32.totalorder %s90, %s104
    %p106 = scmp.eq.s32.totalorder %s17, 0
    %p107 = por %p105, %p106
    %s109 = sadd.s32 %s108, 1
    %p112 = scmp.eq.s32.totalorder %s11, 1
    %p113 = scmp.ne.s32.totalorder %s108, %s110
    %p114 = scmp.eq.s32.totalorder %s11, 0
    %p115 = por %p113, %p114
    %p116 = scmp.ne.s32.totalorder %s108, %s110
    %p117 = scmp.eq.s32.totalorder %s16, 1
    %p118 = por %p116, %p117
    %p119 = scmp.ne.s32.totalorder %s110, %s111
    %p120 = scmp.eq.s32.totalorder %s16, 0
    %p121 = por %p119, %p120
    %p122 = scmp.ne.s32.totalorder %s110, %s111
    %p123 = scmp.eq.s32.totalorder %s17, 1
    %p124 = por %p122, %p123
    %p126 = scmp.ne.s32.totalorder %s111, %s125
    %p127 = scmp.eq.s32.totalorder %s17, 0
    %p128 = por %p126, %p127
    %s129 = ssub.s32 %s11, %s18
    %p130 = scmp.eq.s32.totalorder %s129, 0
    %s132 = sadd.s32 %s131, 1
    %s133 = scalar_select %p130, %s131, %s132
    %p136 = pneg %p130
    %p137 = scmp.eq.s32.totalorder %s11, 1
    %p138 = por %p136, %p137
    %p139 = scmp.ne.s32.totalorder %s131, %s134
    %p140 = scmp.eq.s32.totalorder %s11, 0
    %p141 = por %p139, %p140
    %p142 = scmp.ne.s32.totalorder %s131, %s134
    %p143 = scmp.eq.s32.totalorder %s16, 1
    %p144 = por %p142, %p143
    %p145 = scmp.ne.s32.totalorder %s134, %s135
    %p146 = scmp.eq.s32.totalorder %s16, 0
    %p147 = por %p145, %p146
    %p148 = scmp.ne.s32.totalorder %s134, %s135
    %p149 = scmp.eq.s32.totalorder %s17, 1
    %p150 = por %p148, %p149
    %p152 = scmp.ne.s32.totalorder %s135, %s151
    %p153 = scmp.eq.s32.totalorder %s17, 0
    %p154 = por %p152, %p153
    %p155 = scmp.le.s32.totalorder 1, %s11
    %p156 = scmp.lt.s32.totalorder %s11, 3
    %p157 = pnand %p155, %p156
    %p158 = pneg %p157
    // Predicated region
    $region9: #{my_basic_block_forward.1} parent=5 // pred_check
      _
    $region10: #{my_basic_block_forward.1} parent=5 // pred_check_branch
      %160 = sbr.rel (%p157) target = $region12
    $region11: #{my_basic_block_forward.1} parent=5 // pred_region
      %s161 = ssub.s32 %s11, 1
      // Predicated region
      $region13: #{my_basic_block_forward.1} parent=11 // pred_check
        %p162 = pneg %p58
      $region14: #{my_basic_block_forward.1} parent=11 // pred_check_branch
        %164 = sbr.rel (%p162) target = $region16
      $region15: #{my_basic_block_forward.1} parent=11 // pred_region
        _
      $region16: #{my_basic_block_forward.1} parent=11 // pred_fallthru
        _
      // Predicated region
      $region17: #{my_basic_block_forward.1} parent=11 // pred_check
        %p165 = pneg %p79
      $region18: #{my_basic_block_forward.1} parent=11 // pred_check_branch
        %167 = sbr.rel (%p165) target = $region20
      $region19: #{my_basic_block_forward.1} parent=11 // pred_region
        _
      $region20: #{my_basic_block_forward.1} parent=11 // pred_fallthru
        _
      // Predicated region
      $region21: #{my_basic_block_forward.1} parent=11 // pred_check
        %p168 = pneg %p100
      $region22: #{my_basic_block_forward.1} parent=11 // pred_check_branch
        %170 = sbr.rel (%p168) target = $region24
      $region23: #{my_basic_block_forward.1} parent=11 // pred_region
        _
      $region24: #{my_basic_block_forward.1} parent=11 // pred_fallthru
        _
      // Predicated region
      $region25: #{my_basic_block_forward.1} parent=11 // pred_check
        %p171 = pneg %p121
      $region26: #{my_basic_block_forward.1} parent=11 // pred_check_branch
        %173 = sbr.rel (%p171) target = $region28
      $region27: #{my_basic_block_forward.1} parent=11 // pred_region
        _
      $region28: #{my_basic_block_forward.1} parent=11 // pred_fallthru
        _
    $region12: #{my_basic_block_forward.1} parent=5 // pred_fallthru
      _
    %p174 = scmp.lt.s32.totalorder %s11, 2
    // Predicated region
    $region29: #{my_basic_block_forward.1} parent=5 // pred_check
      %p175 = pneg %p174
    $region30: #{my_basic_block_forward.1} parent=5 // pred_check_branch
      %177 = sbr.rel (%p175) target = $region32
    $region31: #{my_basic_block_forward.1} parent=5 // pred_region
      // Predicated region
      $region33: #{my_basic_block_forward.1} parent=31 // pred_check
        %p178 = pneg %p31
      $region34: #{my_basic_block_forward.1} parent=31 // pred_check_branch
        %180 = sbr.rel (%p178) target = $region36
      $region35: #{my_basic_block_forward.1} parent=31 // pred_region
        %p181 = scmp.lt.s32.totalorder %s11, 1
        %s182 = scalar_select %p181, %s11, 1
        %s183 = smul.addr %s182, 8
        %s184 = scalar_lea.vmem %s0, %s183
      $region36: #{my_basic_block_forward.1} parent=31 // pred_fallthru
        _
    $region32: #{my_basic_block_forward.1} parent=5 // pred_fallthru
      _
    %p185 = scmp.le.s32.totalorder 1, %s11
    %p186 = scmp.lt.s32.totalorder %s11, 3
    %p187 = pnand %p185, %p186
    %p188 = pneg %p187
    // Predicated region
    $region37: #{my_basic_block_forward.1} parent=5 // pred_check
      _
    $region38: #{my_basic_block_forward.1} parent=5 // pred_check_branch
      %190 = sbr.rel (%p187) target = $region40
    $region39: #{my_basic_block_forward.1} parent=5 // pred_region
      %s191 = ssub.s32 %s11, 1
      %p192 = scmp.lt.s32.totalorder %s16, 1
      %s193 = scalar_select %p192, %s16, 1
      %s194 = smul.addr %s193, 8
      %s195 = scalar_lea.vmem %s0, %s194
      %p196 = pneg %p37
      %p197 = pneg %p34
      %p198 = pneg %p58
      %p199 = pneg %p55
      %p200 = pneg %p79
      %p201 = pneg %p76
      %p202 = pneg %p100
      %p203 = pneg %p97
      %p204 = pneg %p121
      %p205 = pneg %p118
      %p206 = pneg %p147
      %p207 = pneg %p144
      %p208 = scmp.lt.s32.totalorder %s16, 1
      %s209 = scalar_select %p208, %s16, 1
      %s210 = smul.addr %s209, 4
      %s211 = smul.addr %s210, 8
      %s212 = scalar_lea.vmem %s5, %s211
      %p213 = scmp.lt.s32.totalorder %s16, 1
      %s214 = scalar_select %p213, %s16, 1
      %s215 = smul.addr %s214, 8
      %s216 = scalar_lea.vmem %s0, %s215
      %p217 = scmp.lt.s32.totalorder %s16, 1
      %s218 = scalar_select %p217, %s16, 1
      %s219 = smul.addr %s218, 4
      %s220 = smul.addr %s219, 8
      %s221 = scalar_lea.vmem %s5, %s220
      %v222 = vld [vmem:[%s216] sm:$0x1f]
      %v223 = vld [vmem:[%s1] sm:$0xff]
      %v224 = vld [vmem:[%s1 + $0x8] sm:$0xff]
      %226 = vset.pattern.permute.xlu0 0
      %227 = vperm.xlu0 %226, %v223
      %v228 = vpop.permute.xlu0 %227
      %231 = vset.pattern.permute.xlu0 0
      %232 = vperm.xlu0 %231, %v224
      %v233 = vpop.permute.xlu0 %232
      %v235 = vlaneseq
      %v236 = vshrl.u32 %v235, 7
      %v237 = vsub.s32 0, %v236
      %v238 = vrot.slane %v222, %v237
      %v239 = vmul.f32 %v228, %v238
      %v240 = vmul.f32 %v233, %v238
      %241 = vset.pattern.permute.xlu0 1
      %242 = vperm.xlu0 %241, %v223
      %v243 = vpop.permute.xlu0 %242
      %245 = vset.pattern.permute.xlu0 1
      %246 = vperm.xlu0 %245, %v224
      %v247 = vpop.permute.xlu0 %246
      %v249 = vlaneseq
      %v250 = vshrl.u32 %v249, 7
      %v251 = vsub.s32 1, %v250
      %v252 = vrot.slane %v222, %v251
      %v253 = vmul.f32 %v243, %v252
      %v254 = vmul.f32 %v247, %v252
      %v255 = vadd.f32 %v239, %v253
      %v256 = vadd.f32 %v240, %v254
      %257 = vset.pattern.permute.xlu0 2
      %258 = vperm.xlu0 %257, %v223
      %v259 = vpop.permute.xlu0 %258
      %261 = vset.pattern.permute.xlu0 2
      %262 = vperm.xlu0 %261, %v224
      %v263 = vpop.permute.xlu0 %262
      %v265 = vlaneseq
      %v266 = vshrl.u32 %v265, 7
      %v267 = vsub.s32 2, %v266
      %v268 = vrot.slane %v222, %v267
      %v269 = vmul.f32 %v259, %v268
      %v270 = vmul.f32 %v263, %v268
      %v271 = vadd.f32 %v255, %v269
      %v272 = vadd.f32 %v256, %v270
      %273 = vset.pattern.permute.xlu0 3
      %274 = vperm.xlu0 %273, %v223
      %v275 = vpop.permute.xlu0 %274
      %277 = vset.pattern.permute.xlu0 3
      %278 = vperm.xlu0 %277, %v224
      %v279 = vpop.permute.xlu0 %278
      %v281 = vlaneseq
      %v282 = vshrl.u32 %v281, 7
      %v283 = vsub.s32 3, %v282
      %v284 = vrot.slane %v222, %v283
      %v285 = vmul.f32 %v275, %v284
      %v286 = vmul.f32 %v279, %v284
      %v287 = vadd.f32 %v271, %v285
      %v288 = vadd.f32 %v272, %v286
      %289 = vset.pattern.permute.xlu0 4
      %290 = vperm.xlu0 %289, %v223
      %v291 = vpop.permute.xlu0 %290
      %293 = vset.pattern.permute.xlu0 4
      %294 = vperm.xlu0 %293, %v224
      %v295 = vpop.permute.xlu0 %294
      %v297 = vlaneseq
      %v298 = vshrl.u32 %v297, 7
      %v299 = vsub.s32 4, %v298
      %v300 = vrot.slane %v222, %v299
      %v301 = vmul.f32 %v291, %v300
      %v302 = vmul.f32 %v295, %v300
      %v303 = vadd.f32 %v287, %v301
      %v304 = vadd.f32 %v288, %v302
      %v305 = vld [vmem:[%s2] sm:$0xff]
      %v306 = vld [vmem:[%s2 + $0x8] sm:$0xff]
      %308 = vset.pattern.permute.xlu0 0
      %309 = vperm.xlu0 %308, %v305
      %v310 = vpop.permute.xlu0 %309
      %313 = vset.pattern.permute.xlu0 0
      %314 = vperm.xlu0 %313, %v306
      %v315 = vpop.permute.xlu0 %314
      %v317 = vadd.f32 %v303, %v310
      %v318 = vadd.f32 %v304, %v315
      %v319 = vmax.f32 %v317, 0.0
      %v320 = vmax.f32 %v318, 0.0
      %323 = vrot.lane.b32.xlu0 %v319, 88
      %v324 = vpop.permute.xlu0 %323
      %325 = vrot.lane.b32.xlu0 %v320, 88
      %v326 = vpop.permute.xlu0 %325
      %329 = vrot.lane.b32.xlu0 %v319, 48
      %v330 = vpop.permute.xlu0 %329
      %331 = vrot.lane.b32.xlu0 %v320, 48
      %v332 = vpop.permute.xlu0 %331
      %335 = vrot.lane.b32.xlu0 %v319, 127
      %v336 = vpop.permute.xlu0 %335
      %337 = vrot.lane.b32.xlu0 %v320, 127
      %v338 = vpop.permute.xlu0 %337
      %341 = vrot.lane.b32.xlu0 %v319, 87
      %v342 = vpop.permute.xlu0 %341
      %343 = vrot.lane.b32.xlu0 %v320, 87
      %v344 = vpop.permute.xlu0 %343
      %v347 = vld [vmem:[%s3] sm:$0xff]
      %v348 = vld [vmem:[%s3 + $0x8] sm:$0xff]
      %v349 = vld [vmem:[%s3 + $0x10] sm:$0xff]
      %v350 = vld [vmem:[%s3 + $0x18] sm:$0xff]
      %v351 = vld [vmem:[%s4] sm:$0xff]
      %v352 = vld [vmem:[%s4 + $0x8] sm:$0xff]
      %v353 = vld [vmem:[%s4 + $0x10] sm:$0xff]
      %v354 = vld [vmem:[%s4 + $0x18] sm:$0xff]
      %356 = vset.pattern.permute.xlu0 0
      %357 = vperm.xlu0 %356, %v351
      %v358 = vpop.permute.xlu0 %357
      %361 = vset.pattern.permute.xlu0 0
      %362 = vperm.xlu0 %361, %v352
      %v363 = vpop.permute.xlu0 %362
      %366 = vset.pattern.permute.xlu0 0
      %367 = vperm.xlu0 %366, %v353
      %v368 = vpop.permute.xlu0 %367
      %371 = vset.pattern.permute.xlu0 0
      %372 = vperm.xlu0 %371, %v354
      %v373 = vpop.permute.xlu0 %372
      %vm375 = vcmask 654336
      %v377 = vsel %vm375, %v347, 0
      %v380 = vsel %vm375, %v348, 0
      %v383 = vsel %vm375, %v349, 0
      %v386 = vsel %vm375, %v350, 0
      %388 = vmatprep.subr.mxu0 0.0
      %389 = vmatpush1.msra.mxu0 %v319
      %390 = vmatprep.subr.mxu0 0.0
      %391 = vmatpush1.msra.mxu0 %v320
      %392 = vmatprep.subr.mxu0 0.0
      %393 = vmatpush1.msra.mxu0 %v324
      %394 = vmatprep.subr.mxu0 0.0
      %395 = vmatpush1.msra.mxu0 %v326
      %396 = vmatprep.subr.mxu0 0.0
      %397 = vmatpush1.msra.mxu0 %v330
      %398 = vmatprep.subr.mxu0 0.0
      %399 = vmatpush1.msra.mxu0 %v332
      %400 = vmatprep.subr.mxu0 0.0
      %401 = vmatpush1.msra.mxu0 %v336
      %402 = vmatprep.subr.mxu0 0.0
      %403 = vmatpush1.msra.mxu0 %v338
      %404 = vmatprep.subr.mxu0 0.0
      %405 = vmatpush1.msra.mxu0 %v342
      %406 = vmatprep.subr.mxu0 0.0
      %407 = vmatpush1.msra.mxu0 %v344
      %408 = vmatprep.subr.mxu0 0.0
      %409 = vmatpush1.msra.mxu0 0.0
      %410 = vmatprep.subr.mxu0 0.0
      %411 = vmatpush1.msra.mxu0 0.0
      %412 = vmatprep.subr.mxu0 0.0
      %413 = vmatpush1.msra.mxu0 0.0
      %414 = vmatprep.subr.mxu0 0.0
      %415 = vmatpush1.msra.mxu0 0.0
      %416 = vmatprep.subr.mxu0 0.0
      %417 = vmatpush1.msra.mxu0 0.0
      %418 = vmatprep.subr.mxu0 0.0
      %419 = vmatpush1.msra.mxu0 0.0
      %420 = vmatprep.subr.mxu0 0.0
      %421 = vmatpush1.msra.mxu0 0.0
      %422 = vmatprep.subr.mxu0 0.0
      %423 = vmatpush1.msra.mxu0 0.0
      %424 = vmatprep.subr.mxu0 0.0
      %425 = vmatpush1.msra.mxu0 0.0
      %426 = vmatprep.subr.mxu0 0.0
      %427 = vmatpush1.msra.mxu0 0.0
      %428 = vmatprep.subr.mxu0 0.0
      %429 = vmatpush1.msra.mxu0 0.0
      %430 = vmatprep.subr.mxu0 0.0
      %431 = vmatpush1.msra.mxu0 0.0
      %432 = vmatprep.subr.mxu0 0.0
      %433 = vmatpush1.msra.mxu0 0.0
      %434 = vmatprep.subr.mxu0 0.0
      %435 = vmatpush1.msra.mxu0 0.0
      %436 = vmatprep.subr.mxu0 0.0
      %437 = vmatpush1.msra.mxu0 0.0
      %438 = vmatprep.subr.mxu0 0.0
      %439 = vmatpush1.msra.mxu0 0.0
      %440 = vmatprep.subr.mxu0 0.0
      %441 = vmatpush1.msra.mxu0 0.0
      %442 = vmatprep.subr.mxu0 0.0
      %443 = vmatpush1.msra.mxu0 0.0
      %444 = vmatprep.subr.mxu0 0.0
      %445 = vmatpush1.msra.mxu0 0.0
      %446 = vmatprep.subr.mxu0 0.0
      %447 = vmatpush1.msra.mxu0 0.0
      %448 = vmatprep.subr.mxu0 0.0
      %449 = vmatpush1.msra.mxu0 0.0
      %450 = vmatprep.subr.mxu0 0.0
      %451 = vmatpush1.msra.mxu0 0.0
      %452 = vmatprep.mubr.f32.mxu0 0.0
      %453 = vmatmul.mubr.f32.gmra.mrb[0].mxu0 %v377
      %v454 = vpop.f32.mrb[0].mxu0
      %v455 = vadd.f32 %v358, %v454
      %v456 = vpop.f32.mrb[0].mxu0
      %457 = vmatprep.mubr.f32.mxu0 0.0
      %458 = vmatmul.mubr.f32.gmra.mrb[0].mxu0 %v380
      %v459 = vpop.f32.mrb[0].mxu0
      %v460 = vadd.f32 %v363, %v459
      %v461 = vpop.f32.mrb[0].mxu0
      %462 = vmatprep.mubr.f32.mxu0 0.0
      %463 = vmatmul.mubr.f32.gmra.mrb[0].mxu0 %v383
      %v464 = vpop.f32.mrb[0].mxu0
      %v465 = vadd.f32 %v368, %v464
      %v466 = vpop.f32.mrb[0].mxu0
      %467 = vmatprep.mubr.f32.mxu0 0.0
      %468 = vmatmul.mubr.f32.gmra.mrb[0].mxu0 %v386
      %v469 = vpop.f32.mrb[0].mxu0
      %v470 = vadd.f32 %v373, %v469
      %v471 = vpop.f32.mrb[0].mxu0
      %472 = vdwg.mxu0
      %v473 = vmax.f32 %v455, 0.0
      %v474 = vmax.f32 %v460, 0.0
      %v475 = vmax.f32 %v465, 0.0
      %v476 = vmax.f32 %v470, 0.0
      %vm477 = vcmask 318464
      %478 = vst.msk [vmem:[%s221] sm:$0xff] %vm477, %v473
      %479 = vst.msk [vmem:[%s221 + $0x8] sm:$0xff] %vm477, %v474
      %480 = vst.msk [vmem:[%s221 + $0x10] sm:$0xff] %vm477, %v475
      %481 = vst.msk [vmem:[%s221 + $0x18] sm:$0xff] %vm477, %v476
      %p482 = scmp.lt.s32.totalorder %s16, 1
      %s483 = scalar_select %p482, %s16, 1
      %s484 = smul.addr %s483, 4
      %s485 = smul.addr %s484, 8
      %s486 = scalar_lea.vmem %s5, %s485
      // Predicated region
      $region41: #{my_basic_block_forward.1} parent=39 // pred_check
        %p487 = pneg %p144
      $region42: #{my_basic_block_forward.1} parent=39 // pred_check_branch
        %489 = sbr.rel (%p487) target = $region44
      $region43: #{my_basic_block_forward.1} parent=39 // pred_region
        _
      $region44: #{my_basic_block_forward.1} parent=39 // pred_fallthru
        _
    $region40: #{my_basic_block_forward.1} parent=5 // pred_fallthru
      _
    %p490 = scmp.le.s32.totalorder 2, %s11
    // Predicated region
    $region45: #{my_basic_block_forward.1} parent=5 // pred_check
      %p491 = pneg %p490
    $region46: #{my_basic_block_forward.1} parent=5 // pred_check_branch
      %493 = sbr.rel (%p491) target = $region48
    $region47: #{my_basic_block_forward.1} parent=5 // pred_region
      %s494 = ssub.s32 %s11, 2
      // Predicated region
      $region49: #{my_basic_block_forward.1} parent=47 // pred_check
        %p495 = pneg %p150
      $region50: #{my_basic_block_forward.1} parent=47 // pred_check_branch
        %497 = sbr.rel (%p495) target = $region52
      $region51: #{my_basic_block_forward.1} parent=47 // pred_region
        %p498 = scmp.lt.s32.totalorder %s17, 1
        %s499 = scalar_select %p498, %s17, 1
        %s500 = smul.addr %s499, 4
        %s501 = smul.addr %s500, 8
        %s502 = scalar_lea.vmem %s5, %s501
      $region52: #{my_basic_block_forward.1} parent=47 // pred_fallthru
        _
    $region48: #{my_basic_block_forward.1} parent=5 // pred_fallthru
      _
  $region6: #{my_basic_block_forward.1} parent=0 // loop_footer
    %s15 = sadd.s32 1, %s11
  $region7: #{my_basic_block_forward.1} parent=0 // loop_footer_branch
    %10 = sbr.rel target = $region3
  $region8: #{my_basic_block_forward.1} parent=0 // loop_exit
    _

</llo_original>
